<compile_context>
chip_gen: v5e
topology: v5e:2x2
jax: 0.10.0
libtpu: 0.0.40
codegen_flags: <defaults>
</compile_context>

<pallas_src>
import jax
import jax.numpy as jnp
from jax.experimental import pallas as pl
from jax.experimental.pallas import tpu as pltpu


# ----------------------------------------------------------------------------
# helpers
# ----------------------------------------------------------------------------
def _round_up(x, m):
    return ((x + m - 1) // m) * m


def _vmem_capacity_bytes():
    """Physical VMEM per TensorCore (64 MiB on v7x, 128 MiB on v5e/v6e)."""
    try:
        info = pltpu.get_tpu_info()
        cap = getattr(info, "vmem_capacity_bytes", None)
        if cap:
            return int(cap)
    except Exception:
        pass
    try:
        kind = jax.devices()[0].device_kind.lower()
        if "v5" in kind or "v6" in kind:
            return 128 * 1024 * 1024
    except Exception:
        pass
    return 64 * 1024 * 1024  # conservative default


def _choose_tf(d_ff, target):
    """d_ff slab width (multiple of 128 lanes). Returns (tf, padded_d_ff)."""
    target = max(128, (target // 128) * 128)
    if d_ff <= target:
        return d_ff, d_ff           # full-extent block: no 128 constraint
    t = target
    while t >= 128:
        if d_ff % t == 0:
            return t, d_ff
        t -= 128
    # No 128-multiple divisor (e.g. d_ff=2730): zero-pad d_ff. Padded columns
    # of W1, rows of W2 and entries of b1 are zero -> contribute nothing.
    return target, _round_up(d_ff, target)


# ----------------------------------------------------------------------------
# kernels
# ----------------------------------------------------------------------------
def _ffn_kernel_resident(x_ref, w1_ref, b1_ref, w2_ref, b2_ref, o_ref):
    # Whole FFN for one row tile; W1/W2/b1/b2 are grid-invariant (VMEM-resident).
    h = jnp.dot(x_ref[...], w1_ref[...], preferred_element_type=jnp.float32)
    h = jnp.maximum(h + b1_ref[...], 0.0)
    # TODO(synk): training-mode dropout (pltpu.prng_seed + prng_random_bits mask)
    # omitted — nn.Dropout is identity in eval().
    y = jnp.dot(h.astype(w2_ref.dtype), w2_ref[...],
                preferred_element_type=jnp.float32)
    o_ref[...] = (y + b2_ref[...]).astype(o_ref.dtype)


def _ffn_kernel_slab_out_acc(x_ref, w1_ref, b1_ref, w2_ref, b2_ref, o_ref):
    # d_ff slabbed on grid axis 1 ("arbitrary"); o_ref is f32 and resident
    # across the reduction, so accumulate directly into it (no scratch).
    j = pl.program_id(1)

    @pl.when(j == 0)
    def _():
        o_ref[...] = jnp.broadcast_to(b2_ref[...], o_ref.shape).astype(o_ref.dtype)

    h = jnp.dot(x_ref[...], w1_ref[...], preferred_element_type=jnp.float32)
    h = jnp.maximum(h + b1_ref[...], 0.0)
    o_ref[...] += jnp.dot(h.astype(w2_ref.dtype), w2_ref[...],
                          preferred_element_type=jnp.float32)


def _ffn_kernel_slab_scratch(x_ref, w1_ref, b1_ref, w2_ref, b2_ref, o_ref, acc_ref):
    # As above but with an f32 scratch accumulator (low-precision outputs).
    j = pl.program_id(1)

    @pl.when(j == 0)
    def _():
        acc_ref[...] = jnp.zeros_like(acc_ref)

    h = jnp.dot(x_ref[...], w1_ref[...], preferred_element_type=jnp.float32)
    h = jnp.maximum(h + b1_ref[...], 0.0)
    acc_ref[...] += jnp.dot(h.astype(w2_ref.dtype), w2_ref[...],
                            preferred_element_type=jnp.float32)

    @pl.when(j == pl.num_programs(1) - 1)
    def _():
        o_ref[...] = (acc_ref[...] + b2_ref[...]).astype(o_ref.dtype)


# ----------------------------------------------------------------------------
# wrapper
# ----------------------------------------------------------------------------
def positionwise_ffn(x, w1, b1, w2, b2, *, tm=None, tf=None,
                     compute_dtype=jnp.bfloat16, allow_resident=True):
    """x: [batch, seq, d_model]; w1: [d_model, d_ff]; w2: [d_ff, d_model].

    compute_dtype: dtype for the MXU matmuls (default bf16 on v5e/v6e/v7x);
    accumulation and biases stay f32; output keeps x's original dtype.
    """
    batch, seq, d_model = x.shape
    d_ff = w1.shape[1]
    out_dtype = x.dtype

    if compute_dtype is not None:
        x = x.astype(compute_dtype)
        w1 = w1.astype(compute_dtype)
        w2 = w2.astype(compute_dtype)
    b1 = b1.astype(jnp.float32)
    b2 = b2.astype(jnp.float32)

    bpe_x = jnp.dtype(x.dtype).itemsize
    bpe_w = jnp.dtype(w1.dtype).itemsize
    bpe_o = jnp.dtype(out_dtype).itemsize

    M = batch * seq
    # Sublane minimum for row tiles: 8 for f32, 16 when any 16-bit tile exists.
    sub = 8 if (bpe_x == 4 and bpe_o == 4) else 16

    cap = int(_vmem_capacity_bytes() * 0.85)     # leave compiler headroom

    # --- weight residency decision --------------------------------------------
    weight_bytes = 2 * d_model * d_ff * bpe_w + (d_ff + d_model) * 4
    resident = (allow_resident and (tf is None or tf >= d_ff)
                and weight_bytes <= int(0.35 * cap))

    if resident:
        tf_eff, d_ff_pad = d_ff, d_ff
        target_tm = 256 if tm is None else tm
    else:
        big_vmem = cap >= 80 * 1024 * 1024
        # Streamed weights: raise tm so flops per streamed weight byte
        # (~2*tm/bpe_w) clears the compute/BW ratio (v6e ~717, v7x ~310).
        target_tm = tm if tm is not None else (1024 if big_vmem else 512)
        target_tf = tf if tf is not None else 512
        tf_eff, d_ff_pad = _choose_tf(d_ff, target_tf)

    # --- row tile --------------------------------------------------------------
    tm_eff = min(target_tm, _round_up(M, sub))    # limit padding waste
    if tm_eff >= 256:
        tm_eff = (tm_eff // 256) * 256            # MXU-friendly (2x256x256)
    else:
        tm_eff = _round_up(tm_eff, sub)
    tm_eff = max(sub, tm_eff)
    M_pad = _round_up(M, tm_eff)
    n_row_tiles = M_pad // tm_eff

    # --- pad operands -----------------------------------------------------------
    x2d = x.reshape(M, d_model)
    if M_pad != M:
        x2d = jnp.pad(x2d, ((0, M_pad - M), (0, 0)))
    if d_ff_pad != d_ff:
        w1 = jnp.pad(w1, ((0, 0), (0, d_ff_pad - d_ff)))
        w2 = jnp.pad(w2, ((0, d_ff_pad - d_ff), (0, 0)))
        b1 = jnp.pad(b1, ((0, d_ff_pad - d_ff),))
    b1_2d = b1.reshape(1, d_ff_pad)
    b2_2d = b2.reshape(1, d_model)

    # --- cost estimate (account for weight re-streaming when tiled) -------------
    flops = 4 * M_pad * d_model * d_ff_pad
    weight_stream_factor = 1 if resident else n_row_tiles
    bytes_accessed = (M_pad * d_model * (bpe_x + bpe_o)
                      + weight_stream_factor * (2 * d_model * d_ff_pad * bpe_w)
                      + (d_ff_pad + d_model) * 4)
    cost = pl.CostEstimate(flops=int(flops), transcendentals=0,
                           bytes_accessed=int(bytes_accessed))

    def build(use_buffered):
        # Single-buffer grid-invariant blocks (halves resident-weight footprint).
        buf1 = {"pipeline_mode": pl.Buffered(1)} if use_buffered else {}
        if resident:
            grid = (n_row_tiles,)
            in_specs = [
                pl.BlockSpec((tm_eff, d_model), lambda i: (i, 0)),
                pl.BlockSpec((d_model, d_ff_pad), lambda i: (0, 0), **buf1),
                pl.BlockSpec((1, d_ff_pad), lambda i: (0, 0), **buf1),
                pl.BlockSpec((d_ff_pad, d_model), lambda i: (0, 0), **buf1),
                pl.BlockSpec((1, d_model), lambda i: (0, 0), **buf1),
            ]
            out_specs = pl.BlockSpec((tm_eff, d_model), lambda i: (i, 0))
            scratch = []
            kernel = _ffn_kernel_resident
            dims = ("parallel",)
            vmem_est = (2 * tm_eff * d_model * (bpe_x + bpe_o)
                        + (1 if use_buffered else 2) * weight_bytes
                        + tm_eff * d_ff_pad * 4       # h intermediate
                        + tm_eff * d_model * 4)       # f32 result before cast
        else:
            grid = (n_row_tiles, d_ff_pad // tf_eff)  # reduction axis last
            in_specs = [
                pl.BlockSpec((tm_eff, d_model), lambda i, j: (i, 0)),
                pl.BlockSpec((d_model, tf_eff), lambda i, j: (0, j)),
                pl.BlockSpec((1, tf_eff), lambda i, j: (0, j)),
                pl.BlockSpec((tf_eff, d_model), lambda i, j: (j, 0)),
                pl.BlockSpec((1, d_model), lambda i, j: (0, 0), **buf1),
            ]
            out_specs = pl.BlockSpec((tm_eff, d_model), lambda i, j: (i, 0))
            if jnp.dtype(out_dtype) == jnp.dtype(jnp.float32):
                kernel = _ffn_kernel_slab_out_acc     # accumulate into o_ref
                scratch = []
                acc_bytes = 0
            else:
                kernel = _ffn_kernel_slab_scratch
                scratch = [pltpu.VMEM((tm_eff, d_model), jnp.float32)]
                acc_bytes = tm_eff * d_model * 4
            dims = ("parallel", "arbitrary")
            vmem_est = (2 * tm_eff * d_model * (bpe_x + bpe_o)
                        + 2 * 2 * d_model * tf_eff * bpe_w   # W1+W2 slabs, dbl-buf
                        + 2 * tf_eff * 4 + d_model * 4
                        + tm_eff * tf_eff * 4                # h intermediate
                        + acc_bytes)
        vmem_limit = int(min(cap, max(32 * 1024 * 1024, int(vmem_est * 1.5))))
        return pl.pallas_call(
            kernel,
            out_shape=jax.ShapeDtypeStruct((M_pad, d_model), out_dtype),
            grid_spec=pltpu.PrefetchScalarGridSpec(
                num_scalar_prefetch=0,
                grid=grid,
                in_specs=in_specs,
                out_specs=out_specs,
                scratch_shapes=scratch),
            compiler_params=pltpu.CompilerParams(
                dimension_semantics=dims,
                vmem_limit_bytes=vmem_limit),
            cost_estimate=cost,
        )

    try:
        out = build(use_buffered=True)(x2d, w1, b1_2d, w2, b2_2d)
        jax.block_until_ready(out)
    except Exception:
        # pipeline_mode=pl.Buffered(1) unsupported on this jax/libtpu: fall back
        # to default double-buffering (grid-invariant blocks are still DMA'd
        # only when their block index changes).
        out = build(use_buffered=False)(x2d, w1, b1_2d, w2, b2_2d)

    return out[:M].reshape(batch, seq, d_model)


# ----------------------------------------------------------------------------
# reference & test
# ----------------------------------------------------------------------------
def ffn_reference(x, w1, b1, w2, b2):
    h = jnp.maximum(jnp.einsum("bsd,df->bsf", x, w1) + b1, 0.0)
    return jnp.einsum("bsf,fd->bsd", h, w2) + b2


def _make_params(key, d_model, d_ff):
    # PyTorch nn.Linear(d_model, d_ff) stores weight as [d_ff, d_model];
    # we keep the transposed [in, out] layout for direct x @ W.
    k1, k2, k3, k4 = jax.random.split(key, 4)
    bound1 = 1.0 / (d_model ** 0.5)
    w1 = jax.random.uniform(k1, (d_model, d_ff), jnp.float32, -bound1, bound1)
    b1 = jax.random.uniform(k2, (d_ff,), jnp.float32, -bound1, bound1)
    bound2 = 1.0 / (d_ff ** 0.5)
    w2 = jax.random.uniform(k3, (d_ff, d_model), jnp.float32, -bound2, bound2)
    b2 = jax.random.uniform(k4, (d_model,), jnp.float32, -bound2, bound2)
    return w1, b1, w2, b2


if __name__ == "__main__":
    key = jax.random.PRNGKey(0)

    # --- Test 1: small shapes, resident-weight path (default bf16 compute) ----
    batch, seq, d_model, d_ff = 2, 8, 32, 64
    kx, kp = jax.random.split(key)
    x = jax.random.normal(kx, (batch, seq, d_model), dtype=jnp.float32)
    w1, b1, w2, b2 = _make_params(kp, d_model, d_ff)
    y_ref = ffn_reference(x, w1, b1, w2, b2)

    y_bf16 = jax.block_until_ready(positionwise_ffn(x, w1, b1, w2, b2))
    assert y_bf16.shape == (batch, seq, d_model)
    assert jnp.allclose(y_bf16, y_ref, atol=1e-1, rtol=1e-1), "bf16 resident mismatch"

    y_f32 = jax.block_until_ready(
        positionwise_ffn(x, w1, b1, w2, b2, compute_dtype=jnp.float32))
    assert jnp.allclose(y_f32, y_ref, atol=2e-2, rtol=2e-2), "f32 resident mismatch"

    # --- Test 2: multi-tile streamed path (d_ff slabbed, f32 out accumulation) -
    batch2, seq2, d_model2, d_ff2 = 4, 100, 128, 256
    kx2, kp2 = jax.random.split(kp)
    x2 = jax.random.normal(kx2, (batch2, seq2, d_model2), dtype=jnp.float32)
    w1b, b1b, w2b, b2b = _make_params(kp2, d_model2, d_ff2)
    y2_ref = ffn_reference(x2, w1b, b1b, w2b, b2b)

    y2 = jax.block_until_ready(
        positionwise_ffn(x2, w1b, b1b, w2b, b2b, tm=128, tf=128,
                         compute_dtype=jnp.float32, allow_resident=False))
    assert y2.shape == (batch2, seq2, d_model2)
    assert jnp.allclose(y2, y2_ref, atol=2e-2, rtol=2e-2), "streamed f32 mismatch"

    # --- Test 3: bf16 activations/output on the streamed path (scratch acc) ----
    x3 = x2.astype(jnp.bfloat16)
    y3 = jax.block_until_ready(
        positionwise_ffn(x3, w1b, b1b, w2b, b2b, tm=128, tf=128,
                         allow_resident=False))
    y3_ref = ffn_reference(x3.astype(jnp.float32), w1b, b1b, w2b, b2b)
    assert y3.dtype == jnp.bfloat16
    assert jnp.allclose(y3.astype(jnp.float32), y3_ref, atol=1e-1, rtol=1e-1), \
        "streamed bf16 mismatch"

    print("KERNEL_OK")
</pallas_src>

<mosaic_0001>
module attributes {stable_mosaic.version = 11 : i64} {
  func.func @_ffn_kernel_resident(%arg0: i32, %arg1: memref<16x32xbf16, #tpu.memory_space<vmem>>, %arg2: memref<32x64xbf16, #tpu.memory_space<vmem>>, %arg3: memref<1x64xf32, #tpu.memory_space<vmem>>, %arg4: memref<64x32xbf16, #tpu.memory_space<vmem>>, %arg5: memref<1x32xf32, #tpu.memory_space<vmem>>, %arg6: memref<16x32xf32, #tpu.memory_space<vmem>>) attributes {dimension_semantics = [#tpu.dimension_semantics<parallel>], iteration_bounds = array<i64: 1>, scalar_prefetch = 0 : i64, scratch_operands = 0 : i64, tpu.core_type = #tpu.core_type<tc>, window_params = [{transform_indices = @transform_0, window_bounds = array<i64: 16, 32>}, {pipeline_mode = #tpu.pipeline_mode<synchronous>, transform_indices = @transform_1, window_bounds = array<i64: 32, 64>}, {pipeline_mode = #tpu.pipeline_mode<synchronous>, transform_indices = @transform_2, window_bounds = array<i64: 1, 64>}, {pipeline_mode = #tpu.pipeline_mode<synchronous>, transform_indices = @transform_3, window_bounds = array<i64: 64, 32>}, {pipeline_mode = #tpu.pipeline_mode<synchronous>, transform_indices = @transform_4, window_bounds = array<i64: 1, 32>}, {transform_indices = @transform_5, window_bounds = array<i64: 16, 32>}]} {
    %c0 = arith.constant 0 : index
    %c0_0 = arith.constant 0 : index
    %0 = vector.load %arg1[%c0, %c0_0] : memref<16x32xbf16, #tpu.memory_space<vmem>>, vector<16x32xbf16>
    %c0_1 = arith.constant 0 : index
    %c0_2 = arith.constant 0 : index
    %1 = vector.load %arg2[%c0_1, %c0_2] : memref<32x64xbf16, #tpu.memory_space<vmem>>, vector<32x64xbf16>
    %cst = arith.constant dense<0.000000e+00> : vector<16x64xf32>
    %2 = tpu.matmul %0, %1, %cst {dimension_numbers = #tpu.dot_dimension_numbers<[1], [0], [0], [1], [0, 0, 1, 1], [], []>} : vector<16x32xbf16>, vector<32x64xbf16>, vector<16x64xf32> -> vector<16x64xf32>
    %c0_3 = arith.constant 0 : index
    %c0_4 = arith.constant 0 : index
    %3 = vector.load %arg3[%c0_3, %c0_4] : memref<1x64xf32, #tpu.memory_space<vmem>>, vector<1x64xf32>
    %4 = vector.broadcast %3 : vector<1x64xf32> to vector<16x64xf32>
    %5 = arith.addf %2, %4 : vector<16x64xf32>
    %cst_5 = arith.constant 0.000000e+00 : f32
    %6 = vector.broadcast %cst_5 : f32 to vector<16x64xf32>
    %7 = arith.maximumf %5, %6 : vector<16x64xf32>
    %8 = arith.truncf %7 : vector<16x64xf32> to vector<16x64xbf16>
    %c0_6 = arith.constant 0 : index
    %c0_7 = arith.constant 0 : index
    %9 = vector.load %arg4[%c0_6, %c0_7] : memref<64x32xbf16, #tpu.memory_space<vmem>>, vector<64x32xbf16>
    %cst_8 = arith.constant dense<0.000000e+00> : vector<16x32xf32>
    %10 = tpu.matmul %8, %9, %cst_8 {dimension_numbers = #tpu.dot_dimension_numbers<[1], [0], [0], [1], [0, 0, 1, 1], [], []>} : vector<16x64xbf16>, vector<64x32xbf16>, vector<16x32xf32> -> vector<16x32xf32>
    %c0_9 = arith.constant 0 : index
    %c0_10 = arith.constant 0 : index
    %11 = vector.load %arg5[%c0_9, %c0_10] : memref<1x32xf32, #tpu.memory_space<vmem>>, vector<1x32xf32>
    %12 = vector.broadcast %11 : vector<1x32xf32> to vector<16x32xf32>
    %13 = arith.addf %10, %12 : vector<16x32xf32>
    %c0_11 = arith.constant 0 : index
    %c0_12 = arith.constant 0 : index
    %14 = vector.load %arg6[%c0_11, %c0_12] : memref<16x32xf32, #tpu.memory_space<vmem>>, vector<16x32xf32>
    tpu.vector_store %arg6[%c0_11, %c0_12], %13 {strides = array<i32>} : memref<16x32xf32, #tpu.memory_space<vmem>>, vector<16x32xf32>,
    return
  }
  func.func @transform_0(%arg0: i32) -> (i32, i32) {
    %c0_i32 = arith.constant 0 : i32
    %c0_i32_0 = arith.constant 0 : i32
    return %arg0, %c0_i32 : i32, i32
  }
  func.func @transform_1(%arg0: i32) -> (i32, i32) {
    %c0_i32 = arith.constant 0 : i32
    %c0_i32_0 = arith.constant 0 : i32
    %c0_i32_1 = arith.constant 0 : i32
    return %c0_i32, %c0_i32_0 : i32, i32
  }
  func.func @transform_2(%arg0: i32) -> (i32, i32) {
    %c0_i32 = arith.constant 0 : i32
    %c0_i32_0 = arith.constant 0 : i32
    %c0_i32_1 = arith.constant 0 : i32
    return %c0_i32, %c0_i32_0 : i32, i32
  }
  func.func @transform_3(%arg0: i32) -> (i32, i32) {
    %c0_i32 = arith.constant 0 : i32
    %c0_i32_0 = arith.constant 0 : i32
    %c0_i32_1 = arith.constant 0 : i32
    return %c0_i32, %c0_i32_0 : i32, i32
  }
  func.func @transform_4(%arg0: i32) -> (i32, i32) {
    %c0_i32 = arith.constant 0 : i32
    %c0_i32_0 = arith.constant 0 : i32
    %c0_i32_1 = arith.constant 0 : i32
    return %c0_i32, %c0_i32_0 : i32, i32
  }
  func.func @transform_5(%arg0: i32) -> (i32, i32) {
    %c0_i32 = arith.constant 0 : i32
    %c0_i32_0 = arith.constant 0 : i32
    return %arg0, %c0_i32 : i32, i32
  }
}

module attributes {stable_mosaic.version = 11 : i64} {
  func.func @_ffn_kernel_resident(%arg0: i32, %arg1: memref<16x32xbf16, #tpu.memory_space<vmem>>, %arg2: memref<32x64xbf16, #tpu.memory_space<vmem>>, %arg3: memref<1x64xf32, #tpu.memory_space<vmem>>, %arg4: memref<64x32xbf16, #tpu.memory_space<vmem>>, %arg5: memref<1x32xf32, #tpu.memory_space<vmem>>, %arg6: memref<16x32xf32, #tpu.memory_space<vmem>>) attributes {dimension_semantics = [#tpu.dimension_semantics<parallel>], iteration_bounds = array<i64: 1>, scalar_prefetch = 0 : i64, scratch_operands = 0 : i64, tpu.core_type = #tpu.core_type<tc>, window_params = [{transform_indices = @transform_0, window_bounds = array<i64: 16, 32>}, {pipeline_mode = #tpu.pipeline_mode<synchronous>, transform_indices = @transform_1, window_bounds = array<i64: 32, 64>}, {pipeline_mode = #tpu.pipeline_mode<synchronous>, transform_indices = @transform_2, window_bounds = array<i64: 1, 64>}, {pipeline_mode = #tpu.pipeline_mode<synchronous>, transform_indices = @transform_3, window_bounds = array<i64: 64, 32>}, {pipeline_mode = #tpu.pipeline_mode<synchronous>, transform_indices = @transform_4, window_bounds = array<i64: 1, 32>}, {transform_indices = @transform_5, window_bounds = array<i64: 16, 32>}]} {
    %c0 = arith.constant 0 : index
    %c0_0 = arith.constant 0 : index
    %0 = vector.load %arg1[%c0, %c0_0] : memref<16x32xbf16, #tpu.memory_space<vmem>>, vector<16x32xbf16>
    %c0_1 = arith.constant 0 : index
    %c0_2 = arith.constant 0 : index
    %1 = vector.load %arg2[%c0_1, %c0_2] : memref<32x64xbf16, #tpu.memory_space<vmem>>, vector<32x64xbf16>
    %cst = arith.constant dense<0.000000e+00> : vector<16x64xf32>
    %2 = tpu.matmul %0, %1, %cst {dimension_numbers = #tpu.dot_dimension_numbers<[1], [0], [0], [1], [0, 0, 1, 1], [], []>} : vector<16x32xbf16>, vector<32x64xbf16>, vector<16x64xf32> -> vector<16x64xf32>
    %c0_3 = arith.constant 0 : index
    %c0_4 = arith.constant 0 : index
    %3 = vector.load %arg3[%c0_3, %c0_4] : memref<1x64xf32, #tpu.memory_space<vmem>>, vector<1x64xf32>
    %4 = vector.broadcast %3 : vector<1x64xf32> to vector<16x64xf32>
    %5 = arith.addf %2, %4 : vector<16x64xf32>
    %cst_5 = arith.constant 0.000000e+00 : f32
    %6 = vector.broadcast %cst_5 : f32 to vector<16x64xf32>
    %7 = arith.maximumf %5, %6 : vector<16x64xf32>
    %8 = arith.truncf %7 : vector<16x64xf32> to vector<16x64xbf16>
    %c0_6 = arith.constant 0 : index
    %c0_7 = arith.constant 0 : index
    %9 = vector.load %arg4[%c0_6, %c0_7] : memref<64x32xbf16, #tpu.memory_space<vmem>>, vector<64x32xbf16>
    %cst_8 = arith.constant dense<0.000000e+00> : vector<16x32xf32>
    %10 = tpu.matmul %8, %9, %cst_8 {dimension_numbers = #tpu.dot_dimension_numbers<[1], [0], [0], [1], [0, 0, 1, 1], [], []>} : vector<16x64xbf16>, vector<64x32xbf16>, vector<16x32xf32> -> vector<16x32xf32>
    %c0_9 = arith.constant 0 : index
    %c0_10 = arith.constant 0 : index
    %11 = vector.load %arg5[%c0_9, %c0_10] : memref<1x32xf32, #tpu.memory_space<vmem>>, vector<1x32xf32>
    %12 = vector.broadcast %11 : vector<1x32xf32> to vector<16x32xf32>
    %13 = arith.addf %10, %12 : vector<16x32xf32>
    %c0_11 = arith.constant 0 : index
    %c0_12 = arith.constant 0 : index
    %14 = vector.load %arg6[%c0_11, %c0_12] : memref<16x32xf32, #tpu.memory_space<vmem>>, vector<16x32xf32>
    tpu.vector_store %arg6[%c0_11, %c0_12], %13 {strides = array<i32>} : memref<16x32xf32, #tpu.memory_space<vmem>>, vector<16x32xf32>,
    return
  }
  func.func @transform_0(%arg0: i32) -> (i32, i32) {
    %c0_i32 = arith.constant 0 : i32
    %c0_i32_0 = arith.constant 0 : i32
    return %arg0, %c0_i32 : i32, i32
  }
  func.func @transform_1(%arg0: i32) -> (i32, i32) {
    %c0_i32 = arith.constant 0 : i32
    %c0_i32_0 = arith.constant 0 : i32
    %c0_i32_1 = arith.constant 0 : i32
    return %c0_i32, %c0_i32_0 : i32, i32
  }
  func.func @transform_2(%arg0: i32) -> (i32, i32) {
    %c0_i32 = arith.constant 0 : i32
    %c0_i32_0 = arith.constant 0 : i32
    %c0_i32_1 = arith.constant 0 : i32
    return %c0_i32, %c0_i32_0 : i32, i32
  }
  func.func @transform_3(%arg0: i32) -> (i32, i32) {
    %c0_i32 = arith.constant 0 : i32
    %c0_i32_0 = arith.constant 0 : i32
    %c0_i32_1 = arith.constant 0 : i32
    return %c0_i32, %c0_i32_0 : i32, i32
  }
  func.func @transform_4(%arg0: i32) -> (i32, i32) {
    %c0_i32 = arith.constant 0 : i32
    %c0_i32_0 = arith.constant 0 : i32
    %c0_i32_1 = arith.constant 0 : i32
    return %c0_i32, %c0_i32_0 : i32, i32
  }
  func.func @transform_5(%arg0: i32) -> (i32, i32) {
    %c0_i32 = arith.constant 0 : i32
    %c0_i32_0 = arith.constant 0 : i32
    return %arg0, %c0_i32 : i32, i32
  }
}

</mosaic_0001>

<llo_original>
// kernel: tpu_custom_call.1
$region0: #{tpu_custom_call.1}
  #allocation0 [shape = 'u32[]', space=smem, size = 0x4, offset = 0x4, fixed_abs, tag = 'smem constant byte address 0x4 - core index']
  #allocation1 [shape = 'u32[72,128]{1,0:T(1,128)}', space=vmem, size = 0x9000, scoped, tag = 'internal scratch']
  %s0 = inlined_call_operand.vmem [shape: bf16[16,32], index: 0, kind: input, shape index: {}]
  %s1 = inlined_call_operand.vmem [shape: bf16[32,64], index: 1, kind: input, shape index: {}]
  %s2 = inlined_call_operand.vmem [shape: f32[1,64], index: 2, kind: input, shape index: {}]
  %s3 = inlined_call_operand.vmem [shape: bf16[64,32], index: 3, kind: input, shape index: {}]
  %s4 = inlined_call_operand.vmem [shape: f32[1,32], index: 4, kind: input, shape index: {}]
  %s5 = inlined_call_operand.hbm [shape: f32[16,32], index: 5, kind: output, shape index: {}]
  %s6 = sld [smem:[#allocation0]]
  $region30: #{tpu_custom_call.1} parent=0
    _
  %s8 = ssub.s32 1, %s6
  %s9 = scalar_select 0, %s8, %s6
  $region1: #{tpu_custom_call.1} parent=0
    #allocation2 [shape = 'u8[8192]{0}', space=vmem, size = 0x2000, scoped, tag = 'output window, operand 0, single buffered']
    #allocation3 [shape = 's32[1]{0}', space=sflag, size = 0x4, scoped, tag = 'scoped memory for tpu_custom_call.1']
    %10 = vsyncpa [#allocation3], 0
    // Predicated region
    $region2: #{tpu_custom_call.1} parent=1 // pred_check
      _
    $region3: #{tpu_custom_call.1} parent=1 // pred_check_branch
      %12 = sbr.rel (0) target = $region5
    $region4: #{tpu_custom_call.1} parent=1 // pred_region
      _
    $region5: #{tpu_custom_call.1} parent=1 // pred_fallthru
      _
    // Predicated region
    $region6: #{tpu_custom_call.1} parent=1 // pred_check
      _
    $region7: #{tpu_custom_call.1} parent=1 // pred_check_branch
      %14 = sbr.rel (0) target = $region9
    $region8: #{tpu_custom_call.1} parent=1 // pred_region
      _
    $region9: #{tpu_custom_call.1} parent=1 // pred_fallthru
      _
    // Predicated region
    $region10: #{tpu_custom_call.1} parent=1 // pred_check
      _
    $region11: #{tpu_custom_call.1} parent=1 // pred_check_branch
      %16 = sbr.rel (0) target = $region13
    $region12: #{tpu_custom_call.1} parent=1 // pred_region
      _
    $region13: #{tpu_custom_call.1} parent=1 // pred_fallthru
      _
    // Predicated region
    $region14: #{tpu_custom_call.1} parent=1 // pred_check
      _
    $region15: #{tpu_custom_call.1} parent=1 // pred_check_branch
      %18 = sbr.rel (0) target = $region17
    $region16: #{tpu_custom_call.1} parent=1 // pred_region
      _
    $region17: #{tpu_custom_call.1} parent=1 // pred_fallthru
      _
    // Predicated region
    $region18: #{tpu_custom_call.1} parent=1 // pred_check
      _
    $region19: #{tpu_custom_call.1} parent=1 // pred_check_branch
      %20 = sbr.rel (0) target = $region21
    $region20: #{tpu_custom_call.1} parent=1 // pred_region
      _
    $region21: #{tpu_custom_call.1} parent=1 // pred_fallthru
      _
    %v22 = vld [vmem:[%s0] sm:$0xf]
    %v23 = vld [vmem:[%s0 + $0x4] sm:$0xf]
    %v24 = vld [vmem:[%s1] sm:$0xf]
    %v25 = vld [vmem:[%s1 + $0x4] sm:$0xf]
    %v26 = vld [vmem:[%s1 + $0x8] sm:$0xf]
    %v27 = vld [vmem:[%s1 + $0xc] sm:$0xf]
    %v28 = vld [vmem:[%s2] sm:$0x1]
    %v30 = vperm.slane %v28, 0
    %v34 = vunpack.c.l.b16 %v22
    %v35 = vunpack.c.l.b16 %v23
    %v36 = vpack.c.b16 %v35, %v34
    %v41 = vunpack.c.l.b16 %v24
    %v42 = vunpack.c.l.b16 %v25
    %v43 = vunpack.c.l.b16 %v26
    %v44 = vunpack.c.l.b16 %v27
    %v45 = vpack.c.b16 %v42, %v41
    %v46 = vpack.c.b16 %v44, %v43
    %vm49 = vcmask 261120
    %v51 = vsel %vm49, %v36, 0
    %53 = vmatpush.bf16.msra.mxu0 0
    %54 = vmatpush.bf16.msra.mxu0 0
    %55 = vmatpush.bf16.msra.mxu0 0
    %56 = vmatpush.bf16.msra.mxu0 0
    %57 = vmatpush.bf16.msra.mxu0 0
    %58 = vmatpush.bf16.msra.mxu0 0
    %59 = vmatpush.bf16.msra.mxu0 %v46
    %60 = vmatpush.bf16.msra.mxu0 %v45
    %61 = vmatmul.bf16.gmra.mxu0 %v51
    %v62 = vpop.f32.mrf.mxu0
    %v63 = vadd.f32 %v30, %v62
    %v64 = vpop.f32.mrf.mxu0
    %v65 = vadd.f32 %v30, %v64
    %66 = vdwg.mxu0
    %v67 = vmax.f32 %v63, 0.0
    %v68 = vmax.f32 %v65, 0.0
    %v69 = vpack.c.bf16 %v68, %v67
    %v70 = vld [vmem:[%s3] sm:$0xf]
    %v71 = vld [vmem:[%s3 + $0x4] sm:$0xf]
    %v72 = vld [vmem:[%s3 + $0x8] sm:$0xf]
    %v73 = vld [vmem:[%s3 + $0xc] sm:$0xf]
    %v74 = vld [vmem:[%s3 + $0x10] sm:$0xf]
    %v75 = vld [vmem:[%s3 + $0x14] sm:$0xf]
    %v76 = vld [vmem:[%s3 + $0x18] sm:$0xf]
    %v77 = vld [vmem:[%s3 + $0x1c] sm:$0xf]
    %v78 = vld [vmem:[%s4] sm:$0x1]
    %v80 = vperm.slane %v78, 0
    %v90 = vunpack.c.l.b16 %v70
    %v91 = vunpack.c.l.b16 %v71
    %v92 = vunpack.c.l.b16 %v72
    %v93 = vunpack.c.l.b16 %v73
    %v94 = vunpack.c.l.b16 %v74
    %v95 = vunpack.c.l.b16 %v75
    %v96 = vunpack.c.l.b16 %v76
    %v97 = vunpack.c.l.b16 %v77
    %v98 = vpack.c.b16 %v91, %v90
    %v99 = vpack.c.b16 %v93, %v92
    %v100 = vpack.c.b16 %v95, %v94
    %v101 = vpack.c.b16 %v97, %v96
    %vm106 = vcmask 523264
    %v108 = vsel %vm106, %v69, 0
    %110 = vmatpush.bf16.msra.mxu0 0
    %111 = vmatpush.bf16.msra.mxu0 0
    %112 = vmatpush.bf16.msra.mxu0 0
    %113 = vmatpush.bf16.msra.mxu0 0
    %114 = vmatpush.bf16.msra.mxu0 %v101
    %115 = vmatpush.bf16.msra.mxu0 %v100
    %116 = vmatpush.bf16.msra.mxu0 %v99
    %117 = vmatpush.bf16.msra.mxu0 %v98
    %118 = vmatmul.bf16.gmra.mxu0 %v108
    %v119 = vpop.f32.mrf.mxu0
    %v120 = vadd.f32 %v80, %v119
    %v121 = vpop.f32.mrf.mxu0
    %v122 = vadd.f32 %v80, %v121
    %123 = vdwg.mxu0
    %124 = vst.msk [vmem:[#allocation2] sm:$0xff] %vm49, %v120
    %125 = vst.msk [vmem:[#allocation2 + $0x8] sm:$0xff] %vm49, %v122
    // Predicated region
    $region22: #{tpu_custom_call.1} parent=1 // pred_check
      _
    $region23: #{tpu_custom_call.1} parent=1 // pred_check_branch
      %127 = sbr.rel (0) target = $region25
    $region24: #{tpu_custom_call.1} parent=1 // pred_region
      %129 = vsyncadd [#allocation3], 0
      %s130 = sshll.u32 [#allocation2], 4
      %s131 = int_to_ptr.vmem [resolvable:$true] %s130
      %s132 = sshll.u32 %s5, 4
      %s133 = int_to_ptr.hbm [resolvable:$true] %s132
      %138 = dma.vmem_to_hbm [thread:$0]  %s131, 256, %s133, [#allocation3], 128, 128, 8
    $region25: #{tpu_custom_call.1} parent=1 // pred_fallthru
      _
    // Predicated region
    $region26: #{tpu_custom_call.1} parent=1 // pred_check
      _
    $region27: #{tpu_custom_call.1} parent=1 // pred_check_branch
      %140 = sbr.rel (0) target = $region29
    $region28: #{tpu_custom_call.1} parent=1 // pred_region
      %142 = dma.done [#allocation3], 256
    $region29: #{tpu_custom_call.1} parent=1 // pred_fallthru
      _
    %143 = vsyncpa [#allocation3], 1

// kernel: tpu_custom_call.1
$region0: #{tpu_custom_call.1}
  #allocation0 [shape = 'u32[]', space=smem, size = 0x4, offset = 0x4, fixed_abs, tag = 'smem constant byte address 0x4 - core index']
  #allocation1 [shape = 'u32[72,128]{1,0:T(1,128)}', space=vmem, size = 0x9000, scoped, tag = 'internal scratch']
  %s0 = inlined_call_operand.vmem [shape: bf16[16,32], index: 0, kind: input, shape index: {}]
  %s1 = inlined_call_operand.vmem [shape: bf16[32,64], index: 1, kind: input, shape index: {}]
  %s2 = inlined_call_operand.vmem [shape: f32[1,64], index: 2, kind: input, shape index: {}]
  %s3 = inlined_call_operand.vmem [shape: bf16[64,32], index: 3, kind: input, shape index: {}]
  %s4 = inlined_call_operand.vmem [shape: f32[1,32], index: 4, kind: input, shape index: {}]
  %s5 = inlined_call_operand.hbm [shape: f32[16,32], index: 5, kind: output, shape index: {}]
  %s6 = sld [smem:[#allocation0]]
  $region30: #{tpu_custom_call.1} parent=0
    _
  %s8 = ssub.s32 1, %s6
  %s9 = scalar_select 0, %s8, %s6
  $region1: #{tpu_custom_call.1} parent=0
    #allocation2 [shape = 'u8[8192]{0}', space=vmem, size = 0x2000, scoped, tag = 'output window, operand 0, single buffered']
    #allocation3 [shape = 's32[1]{0}', space=sflag, size = 0x4, scoped, tag = 'scoped memory for tpu_custom_call.1']
    %10 = vsyncpa [#allocation3], 0
    // Predicated region
    $region2: #{tpu_custom_call.1} parent=1 // pred_check
      _
    $region3: #{tpu_custom_call.1} parent=1 // pred_check_branch
      %12 = sbr.rel (0) target = $region5
    $region4: #{tpu_custom_call.1} parent=1 // pred_region
      _
    $region5: #{tpu_custom_call.1} parent=1 // pred_fallthru
      _
    // Predicated region
    $region6: #{tpu_custom_call.1} parent=1 // pred_check
      _
    $region7: #{tpu_custom_call.1} parent=1 // pred_check_branch
      %14 = sbr.rel (0) target = $region9
    $region8: #{tpu_custom_call.1} parent=1 // pred_region
      _
    $region9: #{tpu_custom_call.1} parent=1 // pred_fallthru
      _
    // Predicated region
    $region10: #{tpu_custom_call.1} parent=1 // pred_check
      _
    $region11: #{tpu_custom_call.1} parent=1 // pred_check_branch
      %16 = sbr.rel (0) target = $region13
    $region12: #{tpu_custom_call.1} parent=1 // pred_region
      _
    $region13: #{tpu_custom_call.1} parent=1 // pred_fallthru
      _
    // Predicated region
    $region14: #{tpu_custom_call.1} parent=1 // pred_check
      _
    $region15: #{tpu_custom_call.1} parent=1 // pred_check_branch
      %18 = sbr.rel (0) target = $region17
    $region16: #{tpu_custom_call.1} parent=1 // pred_region
      _
    $region17: #{tpu_custom_call.1} parent=1 // pred_fallthru
      _
    // Predicated region
    $region18: #{tpu_custom_call.1} parent=1 // pred_check
      _
    $region19: #{tpu_custom_call.1} parent=1 // pred_check_branch
      %20 = sbr.rel (0) target = $region21
    $region20: #{tpu_custom_call.1} parent=1 // pred_region
      _
    $region21: #{tpu_custom_call.1} parent=1 // pred_fallthru
      _
    %v22 = vld [vmem:[%s0] sm:$0xf]
    %v23 = vld [vmem:[%s0 + $0x4] sm:$0xf]
    %v24 = vld [vmem:[%s1] sm:$0xf]
    %v25 = vld [vmem:[%s1 + $0x4] sm:$0xf]
    %v26 = vld [vmem:[%s1 + $0x8] sm:$0xf]
    %v27 = vld [vmem:[%s1 + $0xc] sm:$0xf]
    %v28 = vld [vmem:[%s2] sm:$0x1]
    %v30 = vperm.slane %v28, 0
    %v34 = vunpack.c.l.b16 %v22
    %v35 = vunpack.c.l.b16 %v23
    %v36 = vpack.c.b16 %v35, %v34
    %v41 = vunpack.c.l.b16 %v24
    %v42 = vunpack.c.l.b16 %v25
    %v43 = vunpack.c.l.b16 %v26
    %v44 = vunpack.c.l.b16 %v27
    %v45 = vpack.c.b16 %v42, %v41
    %v46 = vpack.c.b16 %v44, %v43
    %vm49 = vcmask 261120
    %v51 = vsel %vm49, %v36, 0
    %53 = vmatpush.bf16.msra.mxu0 0
    %54 = vmatpush.bf16.msra.mxu0 0
    %55 = vmatpush.bf16.msra.mxu0 0
    %56 = vmatpush.bf16.msra.mxu0 0
    %57 = vmatpush.bf16.msra.mxu0 0
    %58 = vmatpush.bf16.msra.mxu0 0
    %59 = vmatpush.bf16.msra.mxu0 %v46
    %60 = vmatpush.bf16.msra.mxu0 %v45
    %61 = vmatmul.bf16.gmra.mxu0 %v51
    %v62 = vpop.f32.mrf.mxu0
    %v63 = vadd.f32 %v30, %v62
    %v64 = vpop.f32.mrf.mxu0
    %v65 = vadd.f32 %v30, %v64
    %66 = vdwg.mxu0
    %v67 = vmax.f32 %v63, 0.0
    %v68 = vmax.f32 %v65, 0.0
    %v69 = vpack.c.bf16 %v68, %v67
    %v70 = vld [vmem:[%s3] sm:$0xf]
    %v71 = vld [vmem:[%s3 + $0x4] sm:$0xf]
    %v72 = vld [vmem:[%s3 + $0x8] sm:$0xf]
    %v73 = vld [vmem:[%s3 + $0xc] sm:$0xf]
    %v74 = vld [vmem:[%s3 + $0x10] sm:$0xf]
    %v75 = vld [vmem:[%s3 + $0x14] sm:$0xf]
    %v76 = vld [vmem:[%s3 + $0x18] sm:$0xf]
    %v77 = vld [vmem:[%s3 + $0x1c] sm:$0xf]
    %v78 = vld [vmem:[%s4] sm:$0x1]
    %v80 = vperm.slane %v78, 0
    %v90 = vunpack.c.l.b16 %v70
    %v91 = vunpack.c.l.b16 %v71
    %v92 = vunpack.c.l.b16 %v72
    %v93 = vunpack.c.l.b16 %v73
    %v94 = vunpack.c.l.b16 %v74
    %v95 = vunpack.c.l.b16 %v75
    %v96 = vunpack.c.l.b16 %v76
    %v97 = vunpack.c.l.b16 %v77
    %v98 = vpack.c.b16 %v91, %v90
    %v99 = vpack.c.b16 %v93, %v92
    %v100 = vpack.c.b16 %v95, %v94
    %v101 = vpack.c.b16 %v97, %v96
    %vm106 = vcmask 523264
    %v108 = vsel %vm106, %v69, 0
    %110 = vmatpush.bf16.msra.mxu0 0
    %111 = vmatpush.bf16.msra.mxu0 0
    %112 = vmatpush.bf16.msra.mxu0 0
    %113 = vmatpush.bf16.msra.mxu0 0
    %114 = vmatpush.bf16.msra.mxu0 %v101
    %115 = vmatpush.bf16.msra.mxu0 %v100
    %116 = vmatpush.bf16.msra.mxu0 %v99
    %117 = vmatpush.bf16.msra.mxu0 %v98
    %118 = vmatmul.bf16.gmra.mxu0 %v108
    %v119 = vpop.f32.mrf.mxu0
    %v120 = vadd.f32 %v80, %v119
    %v121 = vpop.f32.mrf.mxu0
    %v122 = vadd.f32 %v80, %v121
    %123 = vdwg.mxu0
    %124 = vst.msk [vmem:[#allocation2] sm:$0xff] %vm49, %v120
    %125 = vst.msk [vmem:[#allocation2 + $0x8] sm:$0xff] %vm49, %v122
    // Predicated region
    $region22: #{tpu_custom_call.1} parent=1 // pred_check
      _
    $region23: #{tpu_custom_call.1} parent=1 // pred_check_branch
      %127 = sbr.rel (0) target = $region25
    $region24: #{tpu_custom_call.1} parent=1 // pred_region
      %129 = vsyncadd [#allocation3], 0
      %s130 = sshll.u32 [#allocation2], 4
      %s131 = int_to_ptr.vmem [resolvable:$true] %s130
      %s132 = sshll.u32 %s5, 4
      %s133 = int_to_ptr.hbm [resolvable:$true] %s132
      %138 = dma.vmem_to_hbm [thread:$0]  %s131, 256, %s133, [#allocation3], 128, 128, 8
    $region25: #{tpu_custom_call.1} parent=1 // pred_fallthru
      _
    // Predicated region
    $region26: #{tpu_custom_call.1} parent=1 // pred_check
      _
    $region27: #{tpu_custom_call.1} parent=1 // pred_check_branch
      %140 = sbr.rel (0) target = $region29
    $region28: #{tpu_custom_call.1} parent=1 // pred_region
      %142 = dma.done [#allocation3], 256
    $region29: #{tpu_custom_call.1} parent=1 // pred_fallthru
      _
    %143 = vsyncpa [#allocation3], 1

</llo_original>
